<compile_context>
chip_gen: v7x
topology: tpu7x:2x2x1
jax: 0.10.0
libtpu: 0.0.40
codegen_flags: <defaults>
</compile_context>

<pallas_src>
import jax
import jax.numpy as jnp
from jax import lax
from jax.experimental import pallas as pl
from jax.experimental.pallas import tpu as pltpu


def _make_grad_loss_kernel(n, tn, cn, l, w):
    """Builds the kernel for (TN, L) input blocks; all sizes are static ints."""
    num_chunks = tn // cn
    sh_up = w % l            # roll amount fetching the row above   (p[k-W])
    sh_dn = (l - w) % l      # roll amount fetching the row below   (p[k+W])
    sh_lf = 1 % l            # roll amount fetching the left column (p[k-1])
    sh_rt = (l - 1) % l      # roll amount fetching the right column(p[k+1])

    def kernel(x_ref, y_ref, out_ref):
        # Boundary masks for the zero-padded shifts: built once, reused for all
        # 12 shifts across x and y and across all chunks.
        col = lax.broadcasted_iota(jnp.int32, (cn, l), 1)
        cmod = col % w
        m_up = col >= w             # a row above exists
        m_dn = col < (l - w)        # a row below exists
        m_lf = cmod >= 1            # a column to the left exists
        m_rt = cmod <= (w - 2)      # a column to the right exists

        def sobel_mag(p):
            # Cross-correlation with kernelx/kernely in separable form, zero
            # padding=1, exactly matching F.conv2d in the PyTorch module:
            #   kernelx = col [1,2,1]  (x) row [-1,0,1]
            #   kernely = col [1,0,-1] (x) row [ 1,2,1]
            up = jnp.where(m_up, pltpu.roll(p, sh_up, axis=1), 0.0)
            dn = jnp.where(m_dn, pltpu.roll(p, sh_dn, axis=1), 0.0)
            v1 = up + 2.0 * p + dn        # vertical [1, 2, 1]
            v2 = up - dn                  # vertical [1, 0, -1]
            gx = (jnp.where(m_rt, pltpu.roll(v1, sh_rt, axis=1), 0.0)
                  - jnp.where(m_lf, pltpu.roll(v1, sh_lf, axis=1), 0.0))
            gy = (jnp.where(m_lf, pltpu.roll(v2, sh_lf, axis=1), 0.0)
                  + 2.0 * v2
                  + jnp.where(m_rt, pltpu.roll(v2, sh_rt, axis=1), 0.0))
            return jnp.abs(gx) + jnp.abs(gy)

        base = pl.program_id(0) * tn

        def body(ci, acc):
            c0 = pl.multiple_of(ci * cn, cn)
            xs = x_ref[pl.ds(c0, cn), :].astype(jnp.float32)
            ys = y_ref[pl.ds(c0, cn), :].astype(jnp.float32)
            d = sobel_mag(xs) - sobel_mag(ys)
            dsq = d * d
            # Zero the contribution of out-of-range tail planes (the last grid
            # block may be partial and its VMEM tail is undefined, possibly
            # NaN, so use a select rather than a multiply).
            plane = base + c0 + lax.broadcasted_iota(jnp.int32, (cn, 1), 0)
            dsq = jnp.where(plane < n, dsq, 0.0)
            return acc + jnp.sum(dsq)

        total = lax.fori_loop(0, num_chunks, body, jnp.float32(0.0),
                              unroll=num_chunks <= 8)
        out_ref[...] = jnp.broadcast_to(total, out_ref.shape).astype(jnp.float32)

    return kernel


def grad_loss(x, y, *, tn_override=None, cn_override=None):
    """x, y: (B, C, H, W) arrays -> scalar MSE of Sobel gradient magnitudes."""
    assert x.shape == y.shape
    b, c, h, w = x.shape
    n = b * c
    l = h * w
    in_bytes = jnp.dtype(x.dtype).itemsize
    xf = x.reshape(n, l)     # lane-dense layout; keep the input dtype (free reshape)
    yf = y.reshape(n, l)

    # Compute chunk (planes per inner fori_loop step): bound the f32 working
    # set to ~256 KiB per temporary so live temporaries stay ~2-3 MiB for any TN.
    cn_cap = max(1, (256 * 1024) // (l * 4))
    # TODO(synk): add H-band (row) tiling with a 1-row halo for planes whose
    # f32 footprint alone exceeds the chunk budget (e.g. >=1080p float32);
    # currently such planes fall back to whole-plane chunks.

    # DMA block (planes per grid step): ~6 MiB of input-dtype bytes per operand
    # -> double-buffered x+y stays ~24 MiB, under default/explicit VMEM limits.
    tn = min(n, max(1, (6 * 1024 * 1024) // max(1, l * in_bytes)))
    if tn == n and n >= 16:
        tn = pl.cdiv(n, 2)            # keep >= 2 blocks so both v7x TCs get work
    if tn < n and tn >= 8:
        tn = (tn // 8) * 8            # sublane-aligned block height
    if tn_override is not None:
        tn = tn_override
    tn = max(1, min(tn, n))

    if cn_override is not None:
        cn = cn_override
    else:
        cap = min(cn_cap, tn)
        divisors = [d for d in range(cap, 0, -1) if tn % d == 0]
        mult8 = [d for d in divisors if d % 8 == 0]
        cn = mult8[0] if mult8 else divisors[0]
    assert tn % cn == 0, (tn, cn)

    num_blocks = pl.cdiv(n, tn)

    dma_bytes = 2 * 2 * tn * l * in_bytes       # 2 operands, double-buffered
    work_bytes = 12 * cn * l * 4                # f32 temporaries per chunk
    vmem_limit = int(min(max(dma_bytes + work_bytes + (2 << 20), 8 << 20),
                         48 << 20))

    kernel = _make_grad_loss_kernel(n, tn, cn, l, w)
    partials = pl.pallas_call(
        kernel,
        out_shape=jax.ShapeDtypeStruct((num_blocks, 8, 128), jnp.float32),
        grid_spec=pltpu.PrefetchScalarGridSpec(
            num_scalar_prefetch=0,
            grid=(num_blocks,),
            in_specs=[
                pl.BlockSpec((tn, l), lambda i: (i, 0)),
                pl.BlockSpec((tn, l), lambda i: (i, 0)),
            ],
            out_specs=pl.BlockSpec((1, 8, 128), lambda i: (i, 0, 0)),
        ),
        compiler_params=pltpu.CompilerParams(
            dimension_semantics=("parallel",),     # independent blocks -> megacore
            vmem_limit_bytes=vmem_limit),
        cost_estimate=pl.CostEstimate(
            flops=int(35 * n * l),
            transcendentals=0,
            bytes_accessed=int(2 * n * l * in_bytes + num_blocks * 8 * 128 * 4)),
    )(xf, yf)

    return jnp.sum(partials[:, 0, 0]) / jnp.float32(n * l)


def _grad_loss_reference(x, y):
    """Pure-JAX reference implementing the same PyTorch semantics."""
    kx = jnp.array([[-1, 0, 1], [-2, 0, 2], [-1, 0, 1]], jnp.float32)
    ky = jnp.array([[1, 2, 1], [0, 0, 0], [-1, -2, -1]], jnp.float32)
    b, c, h, w = x.shape

    def sobel(img):  # img: (N, H, W)
        p = jnp.pad(img.astype(jnp.float32), ((0, 0), (1, 1), (1, 1)))
        gx = jnp.zeros((img.shape[0], h, w), jnp.float32)
        gy = jnp.zeros((img.shape[0], h, w), jnp.float32)
        for di in range(3):
            for dj in range(3):
                win = p[:, di:di + h, dj:dj + w]
                gx = gx + kx[di, dj] * win
                gy = gy + ky[di, dj] * win
        return jnp.abs(gx) + jnp.abs(gy)

    gxm = sobel(x.reshape(b * c, h, w))
    gym = sobel(y.reshape(b * c, h, w))
    return jnp.mean((gxm - gym) ** 2)


if __name__ == "__main__":
    key = jax.random.PRNGKey(0)
    k1, k2, k3, k4 = jax.random.split(key, 4)

    # Default path (single block, single chunk) at the module's natural shape.
    B, C, H, W = 2, 4, 16, 16
    x = jax.random.uniform(k1, (B, C, H, W), dtype=jnp.float32)
    y = jax.random.uniform(k2, (B, C, H, W), dtype=jnp.float32)
    loss = jax.block_until_ready(grad_loss(x, y))
    ref = jax.block_until_ready(_grad_loss_reference(x, y))
    assert jnp.allclose(loss, ref, rtol=1e-5, atol=1e-5), (loss, ref)

    # Multi-block / multi-chunk / masked-tail path (no HBM padding copy).
    x2 = jax.random.uniform(k3, (2, 10, 16, 16), dtype=jnp.float32)
    y2 = jax.random.uniform(k4, (2, 10, 16, 16), dtype=jnp.float32)
    loss2 = jax.block_until_ready(
        grad_loss(x2, y2, tn_override=16, cn_override=8))
    ref2 = jax.block_until_ready(_grad_loss_reference(x2, y2))
    assert jnp.allclose(loss2, ref2, rtol=1e-5, atol=1e-5), (loss2, ref2)

    print("KERNEL_OK")
</pallas_src>

<mosaic_0001>
module attributes {stable_mosaic.version = 11 : i64} {
  func.func @kernel(%arg0: i32, %arg1: memref<8x256xf32, #tpu.memory_space<vmem>>, %arg2: memref<8x256xf32, #tpu.memory_space<vmem>>, %arg3: memref<1x8x128xf32, #tpu.memory_space<vmem>>) attributes {dimension_semantics = [#tpu.dimension_semantics<parallel>], iteration_bounds = array<i64: 1>, scalar_prefetch = 0 : i64, scratch_operands = 0 : i64, tpu.core_type = #tpu.core_type<tc>, window_params = [{transform_indices = @transform_0, window_bounds = array<i64: 8, 256>}, {transform_indices = @transform_1, window_bounds = array<i64: 8, 256>}, {transform_indices = @transform_2, window_bounds = array<i64: 1, 8, 128>}]} {
    %0 = tpu.iota {dimensions = array<i32: 1>} : vector<8x256xi32>
    %c16_i32 = arith.constant 16 : i32
    %c0_i32 = arith.constant 0 : i32
    %1 = arith.cmpi eq, %c16_i32, %c0_i32 : i32
    %c1_i32 = arith.constant 1 : i32
    %2 = arith.select %1, %c1_i32, %c16_i32 : i32
    %3 = vector.broadcast %2 : i32 to vector<8x256xi32>
    %4 = arith.remsi %0, %3 : vector<8x256xi32>
    %c0_i32_0 = arith.constant 0 : i32
    %5 = vector.broadcast %c0_i32_0 : i32 to vector<8x256xi32>
    %6 = arith.cmpi ne, %4, %5 : vector<8x256xi32>
    %c0_i32_1 = arith.constant 0 : i32
    %7 = vector.broadcast %c0_i32_1 : i32 to vector<8x256xi32>
    %8 = arith.cmpi slt, %4, %7 : vector<8x256xi32>
    %c0_i32_2 = arith.constant 0 : i32
    %9 = arith.cmpi slt, %2, %c0_i32_2 : i32
    %10 = vector.broadcast %9 : i1 to vector<8x256xi1>
    %11 = vector.broadcast %10 : vector<8x256xi1> to vector<8x256xi1>
    %12 = arith.xori %8, %11 : vector<8x256xi1>
    %13 = arith.andi %12, %6 : vector<8x256xi1>
    %14 = vector.broadcast %2 : i32 to vector<8x256xi32>
    %15 = arith.addi %4, %14 : vector<8x256xi32>
    %16 = arith.select %13, %15, %4 : vector<8x256xi1>, vector<8x256xi32>
    %c16_i32_3 = arith.constant 16 : i32
    %17 = vector.broadcast %c16_i32_3 : i32 to vector<8x256xi32>
    %18 = arith.cmpi sge, %0, %17 : vector<8x256xi32>
    %c240_i32 = arith.constant 240 : i32
    %19 = vector.broadcast %c240_i32 : i32 to vector<8x256xi32>
    %20 = arith.cmpi slt, %0, %19 : vector<8x256xi32>
    %c1_i32_4 = arith.constant 1 : i32
    %21 = vector.broadcast %c1_i32_4 : i32 to vector<8x256xi32>
    %22 = arith.cmpi sge, %16, %21 : vector<8x256xi32>
    %c14_i32 = arith.constant 14 : i32
    %23 = vector.broadcast %c14_i32 : i32 to vector<8x256xi32>
    %24 = arith.cmpi sle, %16, %23 : vector<8x256xi32>
    %c8_i32 = arith.constant 8 : i32
    %25 = arith.muli %arg0, %c8_i32 : i32
    %cst = arith.constant 0.000000e+00 : f32
    %c0_i32_5 = arith.constant 0 : i32
    %c8_i32_6 = arith.constant 8 : i32
    %26 = arith.muli %c0_i32_5, %c8_i32_6 : i32
    %27 = tpu.assume_multiple %26, 8 : i32
    %28 = arith.index_cast %27 : i32 to index
    %c0 = arith.constant 0 : index
    %29 = vector.load %arg1[%28, %c0] : memref<8x256xf32, #tpu.memory_space<vmem>>, vector<8x256xf32>
    %30 = arith.index_cast %27 : i32 to index
    %c0_7 = arith.constant 0 : index
    %31 = vector.load %arg2[%30, %c0_7] : memref<8x256xf32, #tpu.memory_space<vmem>>, vector<8x256xf32>
    %c16_i32_8 = arith.constant 16 : i32
    %32 = tpu.dynamic_rotate %29 by %c16_i32_8 dim 1 : vector<8x256xf32>, i32 -> vector<8x256xf32>
    %cst_9 = arith.constant 0.000000e+00 : f32
    %33 = vector.broadcast %cst_9 : f32 to vector<8x256xf32>
    %34 = arith.select %18, %32, %33 : vector<8x256xi1>, vector<8x256xf32>
    %c240_i32_10 = arith.constant 240 : i32
    %35 = tpu.dynamic_rotate %29 by %c240_i32_10 dim 1 : vector<8x256xf32>, i32 -> vector<8x256xf32>
    %cst_11 = arith.constant 0.000000e+00 : f32
    %36 = vector.broadcast %cst_11 : f32 to vector<8x256xf32>
    %37 = arith.select %20, %35, %36 : vector<8x256xi1>, vector<8x256xf32>
    %cst_12 = arith.constant 2.000000e+00 : f32
    %38 = vector.broadcast %cst_12 : f32 to vector<8x256xf32>
    %39 = arith.mulf %38, %29 : vector<8x256xf32>
    %40 = arith.addf %34, %39 : vector<8x256xf32>
    %41 = arith.addf %40, %37 : vector<8x256xf32>
    %42 = arith.subf %34, %37 : vector<8x256xf32>
    %c255_i32 = arith.constant 255 : i32
    %43 = tpu.dynamic_rotate %41 by %c255_i32 dim 1 : vector<8x256xf32>, i32 -> vector<8x256xf32>
    %cst_13 = arith.constant 0.000000e+00 : f32
    %44 = vector.broadcast %cst_13 : f32 to vector<8x256xf32>
    %45 = arith.select %24, %43, %44 : vector<8x256xi1>, vector<8x256xf32>
    %c1_i32_14 = arith.constant 1 : i32
    %46 = tpu.dynamic_rotate %41 by %c1_i32_14 dim 1 : vector<8x256xf32>, i32 -> vector<8x256xf32>
    %cst_15 = arith.constant 0.000000e+00 : f32
    %47 = vector.broadcast %cst_15 : f32 to vector<8x256xf32>
    %48 = arith.select %22, %46, %47 : vector<8x256xi1>, vector<8x256xf32>
    %49 = arith.subf %45, %48 : vector<8x256xf32>
    %c1_i32_16 = arith.constant 1 : i32
    %50 = tpu.dynamic_rotate %42 by %c1_i32_16 dim 1 : vector<8x256xf32>, i32 -> vector<8x256xf32>
    %cst_17 = arith.constant 0.000000e+00 : f32
    %51 = vector.broadcast %cst_17 : f32 to vector<8x256xf32>
    %52 = arith.select %22, %50, %51 : vector<8x256xi1>, vector<8x256xf32>
    %cst_18 = arith.constant 2.000000e+00 : f32
    %53 = vector.broadcast %cst_18 : f32 to vector<8x256xf32>
    %54 = arith.mulf %53, %42 : vector<8x256xf32>
    %55 = arith.addf %52, %54 : vector<8x256xf32>
    %c255_i32_19 = arith.constant 255 : i32
    %56 = tpu.dynamic_rotate %42 by %c255_i32_19 dim 1 : vector<8x256xf32>, i32 -> vector<8x256xf32>
    %cst_20 = arith.constant 0.000000e+00 : f32
    %57 = vector.broadcast %cst_20 : f32 to vector<8x256xf32>
    %58 = arith.select %24, %56, %57 : vector<8x256xi1>, vector<8x256xf32>
    %59 = arith.addf %55, %58 : vector<8x256xf32>
    %60 = math.absf %49 : vector<8x256xf32>
    %61 = math.absf %59 : vector<8x256xf32>
    %62 = arith.addf %60, %61 : vector<8x256xf32>
    %c16_i32_21 = arith.constant 16 : i32
    %63 = tpu.dynamic_rotate %31 by %c16_i32_21 dim 1 : vector<8x256xf32>, i32 -> vector<8x256xf32>
    %cst_22 = arith.constant 0.000000e+00 : f32
    %64 = vector.broadcast %cst_22 : f32 to vector<8x256xf32>
    %65 = arith.select %18, %63, %64 : vector<8x256xi1>, vector<8x256xf32>
    %c240_i32_23 = arith.constant 240 : i32
    %66 = tpu.dynamic_rotate %31 by %c240_i32_23 dim 1 : vector<8x256xf32>, i32 -> vector<8x256xf32>
    %cst_24 = arith.constant 0.000000e+00 : f32
    %67 = vector.broadcast %cst_24 : f32 to vector<8x256xf32>
    %68 = arith.select %20, %66, %67 : vector<8x256xi1>, vector<8x256xf32>
    %cst_25 = arith.constant 2.000000e+00 : f32
    %69 = vector.broadcast %cst_25 : f32 to vector<8x256xf32>
    %70 = arith.mulf %69, %31 : vector<8x256xf32>
    %71 = arith.addf %65, %70 : vector<8x256xf32>
    %72 = arith.addf %71, %68 : vector<8x256xf32>
    %73 = arith.subf %65, %68 : vector<8x256xf32>
    %c255_i32_26 = arith.constant 255 : i32
    %74 = tpu.dynamic_rotate %72 by %c255_i32_26 dim 1 : vector<8x256xf32>, i32 -> vector<8x256xf32>
    %cst_27 = arith.constant 0.000000e+00 : f32
    %75 = vector.broadcast %cst_27 : f32 to vector<8x256xf32>
    %76 = arith.select %24, %74, %75 : vector<8x256xi1>, vector<8x256xf32>
    %c1_i32_28 = arith.constant 1 : i32
    %77 = tpu.dynamic_rotate %72 by %c1_i32_28 dim 1 : vector<8x256xf32>, i32 -> vector<8x256xf32>
    %cst_29 = arith.constant 0.000000e+00 : f32
    %78 = vector.broadcast %cst_29 : f32 to vector<8x256xf32>
    %79 = arith.select %22, %77, %78 : vector<8x256xi1>, vector<8x256xf32>
    %80 = arith.subf %76, %79 : vector<8x256xf32>
    %c1_i32_30 = arith.constant 1 : i32
    %81 = tpu.dynamic_rotate %73 by %c1_i32_30 dim 1 : vector<8x256xf32>, i32 -> vector<8x256xf32>
    %cst_31 = arith.constant 0.000000e+00 : f32
    %82 = vector.broadcast %cst_31 : f32 to vector<8x256xf32>
    %83 = arith.select %22, %81, %82 : vector<8x256xi1>, vector<8x256xf32>
    %cst_32 = arith.constant 2.000000e+00 : f32
    %84 = vector.broadcast %cst_32 : f32 to vector<8x256xf32>
    %85 = arith.mulf %84, %73 : vector<8x256xf32>
    %86 = arith.addf %83, %85 : vector<8x256xf32>
    %c255_i32_33 = arith.constant 255 : i32
    %87 = tpu.dynamic_rotate %73 by %c255_i32_33 dim 1 : vector<8x256xf32>, i32 -> vector<8x256xf32>
    %cst_34 = arith.constant 0.000000e+00 : f32
    %88 = vector.broadcast %cst_34 : f32 to vector<8x256xf32>
    %89 = arith.select %24, %87, %88 : vector<8x256xi1>, vector<8x256xf32>
    %90 = arith.addf %86, %89 : vector<8x256xf32>
    %91 = math.absf %80 : vector<8x256xf32>
    %92 = math.absf %90 : vector<8x256xf32>
    %93 = arith.addf %91, %92 : vector<8x256xf32>
    %94 = arith.subf %62, %93 : vector<8x256xf32>
    %95 = arith.mulf %94, %94 : vector<8x256xf32>
    %96 = arith.addi %25, %27 : i32
    %97 = tpu.iota {dimensions = array<i32: 0>} : vector<8x1xi32>
    %98 = vector.broadcast %96 : i32 to vector<8x1xi32>
    %99 = arith.addi %98, %97 : vector<8x1xi32>
    %c8_i32_35 = arith.constant 8 : i32
    %100 = vector.broadcast %c8_i32_35 : i32 to vector<8x1xi32>
    %101 = arith.cmpi slt, %99, %100 : vector<8x1xi32>
    %cst_36 = arith.constant 0.000000e+00 : f32
    %102 = vector.shape_cast %101 : vector<8x1xi1> to vector<8x1xi1>
    %103 = vector.broadcast %102 : vector<8x1xi1> to vector<8x256xi1>
    %104 = vector.broadcast %cst_36 : f32 to vector<8x256xf32>
    %105 = arith.select %103, %95, %104 : vector<8x256xi1>, vector<8x256xf32>
    %106 = vector.shape_cast %105 : vector<8x256xf32> to vector<1x8x256xf32>
    %cst_37 = arith.constant dense<0.000000e+00> : vector<1xf32>
    %107 = vector.multi_reduction <add>, %106, %cst_37 [1, 2] : vector<1x8x256xf32> to vector<1xf32>
    %108 = vector.shape_cast %107 : vector<1xf32> to vector<1x1x1xf32>
    %109 = vector.extract %108[0, 0, 0] : f32 from vector<1x1x1xf32>
    %110 = arith.addf %cst, %109 : f32
    %c1_i32_38 = arith.constant 1 : i32
    %111 = vector.broadcast %110 : f32 to vector<1x8x128xf32>
    %c0_39 = arith.constant 0 : index
    %c0_40 = arith.constant 0 : index
    %c0_41 = arith.constant 0 : index
    %112 = vector.load %arg3[%c0_39, %c0_40, %c0_41] : memref<1x8x128xf32, #tpu.memory_space<vmem>>, vector<1x8x128xf32>
    tpu.vector_store %arg3[%c0_39, %c0_40, %c0_41], %111 {strides = array<i32>} : memref<1x8x128xf32, #tpu.memory_space<vmem>>, vector<1x8x128xf32>,
    return
  }
  func.func @transform_0(%arg0: i32) -> (i32, i32) {
    %c0_i32 = arith.constant 0 : i32
    %c0_i32_0 = arith.constant 0 : i32
    return %arg0, %c0_i32 : i32, i32
  }
  func.func @transform_1(%arg0: i32) -> (i32, i32) {
    %c0_i32 = arith.constant 0 : i32
    %c0_i32_0 = arith.constant 0 : i32
    return %arg0, %c0_i32 : i32, i32
  }
  func.func @transform_2(%arg0: i32) -> (i32, i32, i32) {
    %c0_i32 = arith.constant 0 : i32
    %c0_i32_0 = arith.constant 0 : i32
    %c0_i32_1 = arith.constant 0 : i32
    return %arg0, %c0_i32, %c0_i32_0 : i32, i32, i32
  }
}

</mosaic_0001>

<llo_original>
// kernel: tpu_custom_call.1
$region0: #{tpu_custom_call.1}
  #allocation0 [shape = 'u32[]', space=smem, size = 0x4, offset = 0x4, fixed_abs, tag = 'smem constant byte address 0x4 - core index']
  #allocation1 [shape = 'u32[144,128]{1,0:T(1,128)}', space=vmem, size = 0x12000, scoped, tag = 'internal scratch']
  %s0 = inlined_call_operand.hbm [shape: f32[8,256], index: 0, kind: input, shape index: {}]
  %s1 = inlined_call_operand.hbm [shape: f32[8,256], index: 1, kind: input, shape index: {}]
  %s2 = inlined_call_operand.hbm [shape: f32[1,8,128], index: 2, kind: output, shape index: {}]
  %s3 = sld [smem:[#allocation0]]
  $region26: #{tpu_custom_call.1} parent=0
    _
  %s5 = ssub.s32 1, %s3
  %s6 = scalar_select 0, %s5, %s3
  $region1: #{tpu_custom_call.1} parent=0
    #allocation2 [shape = 'u8[8192]{0}', space=vmem, size = 0x2000, scoped, tag = 'input window, operand 0, single buffered']
    #allocation3 [shape = 's32[1]{0}', space=sflag, size = 0x4, scoped, tag = 'scoped memory for tpu_custom_call.1']
    #allocation4 [shape = 's32[1]{0}', space=sflag, size = 0x4, scoped, tag = 'scoped memory for tpu_custom_call.1']
    #allocation5 [shape = 'u8[8192]{0}', space=vmem, size = 0x2000, scoped, tag = 'input window, operand 1, single buffered']
    #allocation6 [shape = 's32[1]{0}', space=sflag, size = 0x4, scoped, tag = 'scoped memory for tpu_custom_call.1']
    #allocation7 [shape = 'u8[4096]{0}', space=vmem, size = 0x1000, scoped, tag = 'output window, operand 0, single buffered']
    %7 = vsyncpa [#allocation3], 0
    %8 = vsyncpa [#allocation6], 0
    %9 = vsyncpa [#allocation4], 0
    // Predicated region
    $region2: #{tpu_custom_call.1} parent=1 // pred_check
      _
    $region3: #{tpu_custom_call.1} parent=1 // pred_check_branch
      %11 = sbr.rel (0) target = $region5
    $region4: #{tpu_custom_call.1} parent=1 // pred_region
      %s13 = ssub.s32 256, 256
      %14 = vsyncadd [#allocation3], %s13
      %s16 = sshll.u32 [#allocation2], 4
      %s17 = int_to_ptr.vmem [resolvable:$true] %s16
      %19 = dma.hbm_to_vmem [thread:$0]  %s0, 256, %s17, [#allocation3]
    $region5: #{tpu_custom_call.1} parent=1 // pred_fallthru
      _
    // Predicated region
    $region6: #{tpu_custom_call.1} parent=1 // pred_check
      _
    $region7: #{tpu_custom_call.1} parent=1 // pred_check_branch
      %21 = sbr.rel (0) target = $region9
    $region8: #{tpu_custom_call.1} parent=1 // pred_region
      %s23 = ssub.s32 256, 256
      %24 = vsyncadd [#allocation6], %s23
      %s26 = sshll.u32 [#allocation5], 4
      %s27 = int_to_ptr.vmem [resolvable:$true] %s26
      %29 = dma.hbm_to_vmem [thread:$0]  %s1, 256, %s27, [#allocation6]
    $region9: #{tpu_custom_call.1} parent=1 // pred_fallthru
      _
    // Predicated region
    $region10: #{tpu_custom_call.1} parent=1 // pred_check
      _
    $region11: #{tpu_custom_call.1} parent=1 // pred_check_branch
      %31 = sbr.rel (0) target = $region13
    $region12: #{tpu_custom_call.1} parent=1 // pred_region
      %32 = dma.done [#allocation3], 256
    $region13: #{tpu_custom_call.1} parent=1 // pred_fallthru
      _
    // Predicated region
    $region14: #{tpu_custom_call.1} parent=1 // pred_check
      _
    $region15: #{tpu_custom_call.1} parent=1 // pred_check_branch
      %34 = sbr.rel (0) target = $region17
    $region16: #{tpu_custom_call.1} parent=1 // pred_region
      %35 = dma.done [#allocation6], 256
    $region17: #{tpu_custom_call.1} parent=1 // pred_fallthru
      _
    %v36 = vlaneseq
    %v37 = vand.u32 %v36, 127
    %v38 = vadd.s32 %v37, 128
    %vm39 = vcmp.lt.s32.totalorder %v37, 0
    %v40 = vsub.s32 0, %v37
    %v41 = vsel %vm39, %v40, %v37
    %v42 = vshrl.u32 %v41, 4
    %v43 = vand.u32 %v41, 15
    %v44 = vsub.s32 0, %v43
    %v45 = vsel %vm39, %v44, %v43
    %vm46 = vcmp.lt.s32.totalorder %v38, 0
    %v47 = vsub.s32 0, %v38
    %v48 = vsel %vm46, %v47, %v38
    %v49 = vshrl.u32 %v48, 4
    %v50 = vand.u32 %v48, 15
    %v51 = vsub.s32 0, %v50
    %v52 = vsel %vm46, %v51, %v50
    %vm53 = vcmp.ne.s32.totalorder %v45, 0
    %vm54 = vcmp.ne.s32.totalorder %v52, 0
    %vm55 = vcmp.lt.s32.totalorder %v45, 0
    %vm56 = vcmp.lt.s32.totalorder %v52, 0
    %vm57 = vmand %vm55, %vm53
    %vm58 = vmand %vm56, %vm54
    %v59 = vadd.s32 %v45, 16
    %v60 = vadd.s32 %v52, 16
    %v61 = vsel %vm57, %v59, %v45
    %v62 = vsel %vm58, %v60, %v52
    %vm63 = vcmp.ge.s32.totalorder %v37, 16
    %vm64 = vcmp.ge.s32.totalorder %v38, 16
    %vm65 = vcmp.lt.s32.totalorder %v37, 240
    %vm66 = vcmp.lt.s32.totalorder %v38, 240
    %vm67 = vcmp.ge.s32.totalorder %v61, 1
    %vm68 = vcmp.ge.s32.totalorder %v62, 1
    %vm69 = vcmp.le.s32.totalorder %v61, 14
    %vm70 = vcmp.le.s32.totalorder %v62, 14
    %s71 = smul.u32 0, 8
    %s72 = smul.u32 0, 2
    %s73 = smul.addr %s72, 8
    %s74 = scalar_lea.vmem [#allocation2], %s73
    %v75 = vld [vmem:[%s74] sm:$0xff]
    %v76 = vld [vmem:[%s74 + $0x8] sm:$0xff]
    %s77 = smul.addr %s72, 8
    %s78 = scalar_lea.vmem [#allocation5], %s77
    %v79 = vld [vmem:[%s78] sm:$0xff]
    %v80 = vld [vmem:[%s78 + $0x8] sm:$0xff]
    %81 = vrot.lane.b32.xlu0 %v75, 16
    %v82 = vpop.permute.xlu0 %81
    %83 = vrot.lane.b32.xlu0 %v76, 16
    %v84 = vpop.permute.xlu0 %83
    %vm85 = vcmp.lt.s32.totalorder %v37, 16
    %v86 = vsel %vm85, %v82, %v84
    %v87 = vsel %vm85, %v84, %v82
    %v88 = vsel %vm63, %v87, 0.0
    %v89 = vsel %vm64, %v86, 0.0
    %90 = vrot.lane.b32.xlu0 %v75, 112
    %v91 = vpop.permute.xlu0 %90
    %92 = vrot.lane.b32.xlu0 %v76, 112
    %v93 = vpop.permute.xlu0 %92
    %vm94 = vcmp.lt.s32.totalorder %v37, 112
    %v95 = vsel %vm94, %v91, %v93
    %v96 = vsel %vm94, %v93, %v91
    %v97 = vsel %vm65, %v95, 0.0
    %v98 = vsel %vm66, %v96, 0.0
    %v99 = vmul.f32 %v75, 2.0
    %v100 = vmul.f32 %v76, 2.0
    %v101 = vadd.f32 %v88, %v99
    %v102 = vadd.f32 %v89, %v100
    %v103 = vadd.f32 %v101, %v97
    %v104 = vadd.f32 %v102, %v98
    %v105 = vsub.f32 %v88, %v97
    %v106 = vsub.f32 %v89, %v98
    %107 = vrot.lane.b32.xlu0 %v103, 127
    %v108 = vpop.permute.xlu0 %107
    %109 = vrot.lane.b32.xlu0 %v104, 127
    %v110 = vpop.permute.xlu0 %109
    %vm111 = vcmp.lt.s32.totalorder %v37, 127
    %v112 = vsel %vm111, %v108, %v110
    %v113 = vsel %vm111, %v110, %v108
    %v114 = vsel %vm69, %v112, 0.0
    %v115 = vsel %vm70, %v113, 0.0
    %116 = vrot.lane.b32.xlu0 %v103, 1
    %v117 = vpop.permute.xlu0 %116
    %118 = vrot.lane.b32.xlu0 %v104, 1
    %v119 = vpop.permute.xlu0 %118
    %vm120 = vcmp.lt.s32.totalorder %v37, 1
    %v121 = vsel %vm120, %v117, %v119
    %v122 = vsel %vm120, %v119, %v117
    %v123 = vsel %vm67, %v122, 0.0
    %v124 = vsel %vm68, %v121, 0.0
    %v125 = vsub.f32 %v114, %v123
    %v126 = vsub.f32 %v115, %v124
    %127 = vrot.lane.b32.xlu0 %v105, 1
    %v128 = vpop.permute.xlu0 %127
    %129 = vrot.lane.b32.xlu0 %v106, 1
    %v130 = vpop.permute.xlu0 %129
    %v131 = vsel %vm120, %v128, %v130
    %v132 = vsel %vm120, %v130, %v128
    %v133 = vsel %vm67, %v132, 0.0
    %v134 = vsel %vm68, %v131, 0.0
    %v135 = vmul.f32 %v105, 2.0
    %v136 = vmul.f32 %v106, 2.0
    %v137 = vadd.f32 %v133, %v135
    %v138 = vadd.f32 %v134, %v136
    %139 = vrot.lane.b32.xlu0 %v105, 127
    %v140 = vpop.permute.xlu0 %139
    %141 = vrot.lane.b32.xlu0 %v106, 127
    %v142 = vpop.permute.xlu0 %141
    %v143 = vsel %vm111, %v140, %v142
    %v144 = vsel %vm111, %v142, %v140
    %v145 = vsel %vm69, %v143, 0.0
    %v146 = vsel %vm70, %v144, 0.0
    %v147 = vadd.f32 %v137, %v145
    %v148 = vadd.f32 %v138, %v146
    %v149 = vand.u32 2147483647, %v125
    %v150 = vand.u32 2147483647, %v126
    %v151 = vand.u32 2147483647, %v147
    %v152 = vand.u32 2147483647, %v148
    %v153 = vadd.f32 %v149, %v151
    %v154 = vadd.f32 %v150, %v152
    %155 = vrot.lane.b32.xlu0 %v79, 16
    %v156 = vpop.permute.xlu0 %155
    %157 = vrot.lane.b32.xlu0 %v80, 16
    %v158 = vpop.permute.xlu0 %157
    %v159 = vsel %vm85, %v156, %v158
    %v160 = vsel %vm85, %v158, %v156
    %v161 = vsel %vm63, %v160, 0.0
    %v162 = vsel %vm64, %v159, 0.0
    %163 = vrot.lane.b32.xlu0 %v79, 112
    %v164 = vpop.permute.xlu0 %163
    %165 = vrot.lane.b32.xlu0 %v80, 112
    %v166 = vpop.permute.xlu0 %165
    %v167 = vsel %vm94, %v164, %v166
    %v168 = vsel %vm94, %v166, %v164
    %v169 = vsel %vm65, %v167, 0.0
    %v170 = vsel %vm66, %v168, 0.0
    %v171 = vmul.f32 %v79, 2.0
    %v172 = vmul.f32 %v80, 2.0
    %v173 = vadd.f32 %v161, %v171
    %v174 = vadd.f32 %v162, %v172
    %v175 = vadd.f32 %v173, %v169
    %v176 = vadd.f32 %v174, %v170
    %v177 = vsub.f32 %v161, %v169
    %v178 = vsub.f32 %v162, %v170
    %179 = vrot.lane.b32.xlu0 %v175, 127
    %v180 = vpop.permute.xlu0 %179
    %181 = vrot.lane.b32.xlu0 %v176, 127
    %v182 = vpop.permute.xlu0 %181
    %v183 = vsel %vm111, %v180, %v182
    %v184 = vsel %vm111, %v182, %v180
    %v185 = vsel %vm69, %v183, 0.0
    %v186 = vsel %vm70, %v184, 0.0
    %187 = vrot.lane.b32.xlu0 %v175, 1
    %v188 = vpop.permute.xlu0 %187
    %189 = vrot.lane.b32.xlu0 %v176, 1
    %v190 = vpop.permute.xlu0 %189
    %v191 = vsel %vm120, %v188, %v190
    %v192 = vsel %vm120, %v190, %v188
    %v193 = vsel %vm67, %v192, 0.0
    %v194 = vsel %vm68, %v191, 0.0
    %v195 = vsub.f32 %v185, %v193
    %v196 = vsub.f32 %v186, %v194
    %197 = vrot.lane.b32.xlu0 %v177, 1
    %v198 = vpop.permute.xlu0 %197
    %199 = vrot.lane.b32.xlu0 %v178, 1
    %v200 = vpop.permute.xlu0 %199
    %v201 = vsel %vm120, %v198, %v200
    %v202 = vsel %vm120, %v200, %v198
    %v203 = vsel %vm67, %v202, 0.0
    %v204 = vsel %vm68, %v201, 0.0
    %v205 = vmul.f32 %v177, 2.0
    %v206 = vmul.f32 %v178, 2.0
    %v207 = vadd.f32 %v203, %v205
    %v208 = vadd.f32 %v204, %v206
    %209 = vrot.lane.b32.xlu0 %v177, 127
    %v210 = vpop.permute.xlu0 %209
    %211 = vrot.lane.b32.xlu0 %v178, 127
    %v212 = vpop.permute.xlu0 %211
    %v213 = vsel %vm111, %v210, %v212
    %v214 = vsel %vm111, %v212, %v210
    %v215 = vsel %vm69, %v213, 0.0
    %v216 = vsel %vm70, %v214, 0.0
    %v217 = vadd.f32 %v207, %v215
    %v218 = vadd.f32 %v208, %v216
    %v219 = vand.u32 2147483647, %v195
    %v220 = vand.u32 2147483647, %v196
    %v221 = vand.u32 2147483647, %v217
    %v222 = vand.u32 2147483647, %v218
    %v223 = vadd.f32 %v219, %v221
    %v224 = vadd.f32 %v220, %v222
    %v225 = vsub.f32 %v153, %v223
    %v226 = vsub.f32 %v154, %v224
    %v227 = vmul.f32 %v225, %v225
    %v228 = vmul.f32 %v226, %v226
    %s229 = sadd.s32 %s71, 0
    %v230 = vlaneseq
    %v231 = vshrl.u32 %v230, 7
    %v232 = vstv %s229
    %v233 = vadd.s32 %v232, %v231
    %vm234 = vcmp.lt.s32.totalorder %v233, 8
    %v235 = vsel %vm234, 1, 0
    %vm236 = vcmp.eq.s32.totalorder %v235, 1
    %v237 = vsel %vm236, %v227, 0.0
    %v238 = vsel %vm236, %v228, 0.0
    %v239 = vadd.f32 %v237, %v238
    %240 = vadd.xlane.f32.xlu0 %v239
    %v241 = vpop.xlane.xlu0 %240
    %v242 = vrot.slane %v241, 4
    %v243 = vadd.f32 %v241, %v242
    %v244 = vrot.slane %v243, 2
    %v245 = vadd.f32 %v243, %v244
    %v246 = vrot.slane %v245, 1
    %v247 = vadd.f32 %v245, %v246
    %s248 = vtos %v247
    %s249 = sadd.f32 %s248, 0.0
    %v250 = vstv %s249
    %251 = vst [vmem:[#allocation7] sm:$0xff] %v250
    // Predicated region
    $region18: #{tpu_custom_call.1} parent=1 // pred_check
      _
    $region19: #{tpu_custom_call.1} parent=1 // pred_check_branch
      %253 = sbr.rel (0) target = $region21
    $region20: #{tpu_custom_call.1} parent=1 // pred_region
      %s255 = ssub.s32 128, 128
      %256 = vsyncadd [#allocation4], %s255
      %s258 = sshll.u32 [#allocation7], 4
      %s259 = int_to_ptr.vmem [resolvable:$true] %s258
      %261 = dma.vmem_to_hbm [thread:$0]  %s259, 128, %s2, [#allocation4]
    $region21: #{tpu_custom_call.1} parent=1 // pred_fallthru
      _
    // Predicated region
    $region22: #{tpu_custom_call.1} parent=1 // pred_check
      _
    $region23: #{tpu_custom_call.1} parent=1 // pred_check_branch
      %263 = sbr.rel (0) target = $region25
    $region24: #{tpu_custom_call.1} parent=1 // pred_region
      %264 = dma.done [#allocation4], 128
    $region25: #{tpu_custom_call.1} parent=1 // pred_fallthru
      _
    %265 = vsyncpa [#allocation3], 1
    %266 = vsyncpa [#allocation6], 1
    %267 = vsyncpa [#allocation4], 1

</llo_original>
